<compile_context>
chip_gen: v6e
topology: v6e:2x2x1
jax: 0.10.0
libtpu: 0.0.40
codegen_flags: <defaults>
</compile_context>

<pallas_src>
import functools

import jax
import jax.numpy as jnp
from jax.experimental import pallas as pl
from jax.experimental.pallas import tpu as pltpu


def _round_up(x, m):
    return ((x + m - 1) // m) * m


def _cdiv(a, b):
    return -(-a // b)


def _vmem_capacity_bytes():
    try:
        return int(pltpu.get_tpu_info().vmem_capacity_bytes)
    except Exception:
        # Conservative fallback: assume the smallest part (v7x, 64 MiB per TC).
        return 64 * 1024 * 1024


def _vmem_budget_bytes():
    # ~75% of physical VMEM: ~48 MiB on v7x, ~96 MiB on v5e/v6e.
    return int(_vmem_capacity_bytes()) * 3 // 4


def _tile_candidates(total, unit=128):
    """Multiples of `unit` that divide `total`, descending."""
    return [c for c in range(total, 0, -unit) if total % c == 0]


def _vmem_estimate(tm, tn, tk, in_item, out_item):
    return (2 * (tm * tk + tk * tn) * in_item   # double-buffered x / W^T tiles
            + 2 * tm * tn * out_item            # double-buffered output tile
            + tm * tn * 4                       # f32 accumulator scratch
            + 2 * 2 * tn * 4)                   # fused (scale, shift) tile


def _fc_block_kernel(x_ref, wt_ref, ss_ref, o_ref, acc_ref):
    # x_ref:   (tm, tk)  activation tile (compute dtype, e.g. bf16)
    # wt_ref:  (tk, tn)  pre-transposed weight tile (compute dtype)
    # ss_ref:  (2,  tn)  f32 [scale; shift]  (scale = gamma/sqrt(var+eps),
    #                    shift = (bias - mean)*scale + beta)
    # o_ref:   (tm, tn)  output tile
    # acc_ref: (tm, tn)  f32 accumulator (resident across the K axis)
    k = pl.program_id(2)

    @pl.when(k == 0)
    def _():
        acc_ref[...] = jnp.zeros_like(acc_ref)

    acc_ref[...] += jnp.dot(x_ref[...], wt_ref[...],
                            preferred_element_type=jnp.float32)

    @pl.when(k == pl.num_programs(2) - 1)
    def _():
        z = acc_ref[...] * ss_ref[0:1, :] + ss_ref[1:2, :]
        z = jnp.where(z > 0, z, 0.1 * z)          # LeakyReLU(0.1)
        o_ref[...] = z.astype(o_ref.dtype)        # Dropout = identity in eval


def prepare_fc_block_params(w, b, gamma, beta, running_mean, running_var,
                            eps=1e-5, compute_dtype=jnp.bfloat16):
    """One-time parameter folding/padding, OUTSIDE the hot path.

    w: [N, D] (PyTorch Linear layout). Returns:
      wt: [Dp, Np]  pre-transposed, compute-dtype, zero-padded to multiples of 128
      ss: [2,  Np]  f32 rows = (scale, shift)
      n:  original N (for slicing the kernel output)
    """
    n, d = w.shape
    inv_std = jax.lax.rsqrt(running_var.astype(jnp.float32) + eps)
    scale = gamma.astype(jnp.float32) * inv_std
    shift = (b.astype(jnp.float32) - running_mean.astype(jnp.float32)) * scale \
        + beta.astype(jnp.float32)

    wt = w.T.astype(compute_dtype)
    ss = jnp.stack([scale, shift], axis=0)        # (2, N) f32

    dp, np_ = _round_up(d, 128), _round_up(n, 128)
    if dp != d or np_ != n:
        wt = jnp.pad(wt, ((0, dp - d), (0, np_ - n)))
    if np_ != n:
        ss = jnp.pad(ss, ((0, 0), (0, np_ - n)))
    return wt, ss, n


@functools.partial(jax.jit, static_argnames=(
    "n_out", "tm", "tn", "tk", "bp", "batch_inner", "out_dtype", "vmem_limit"))
def _fc_forward(x, wt, ss, *, n_out, tm, tn, tk, bp, batch_inner, out_dtype,
                vmem_limit):
    b, d = x.shape
    dp, np_ = wt.shape
    gm, gn, gk = bp // tm, np_ // tn, dp // tk

    # Cast activations to the compute dtype (bf16 by default) and pad rows / D.
    xc = x.astype(wt.dtype)
    if bp != b or dp != d:
        xc = jnp.pad(xc, ((0, bp - b), (0, dp - d)))

    in_item = jnp.dtype(wt.dtype).itemsize
    out_item = jnp.dtype(out_dtype).itemsize
    if gk == 1:
        streamed = (gn * bp * dp + dp * np_) if batch_inner \
            else (bp * dp + gm * dp * np_)
    else:
        streamed = gm * dp * np_ + gn * bp * dp
    bytes_accessed = streamed * in_item + bp * np_ * out_item + 2 * np_ * 4
    flops = 2 * bp * dp * np_

    if batch_inner:
        # feature axis outer -> the (tk, tn) weight tile stays resident, x streams.
        grid = (gn, gm, gk)
        x_map = lambda j, i, k: (i, k)
        w_map = lambda j, i, k: (k, j)
        s_map = lambda j, i, k: (0, j)
        o_map = lambda j, i, k: (i, j)
    else:
        # batch axis outer -> the (tm, tk) x tile stays resident, weights stream.
        grid = (gm, gn, gk)
        x_map = lambda i, j, k: (i, k)
        w_map = lambda i, j, k: (k, j)
        s_map = lambda i, j, k: (0, j)
        o_map = lambda i, j, k: (i, j)

    out = pl.pallas_call(
        _fc_block_kernel,
        out_shape=jax.ShapeDtypeStruct((bp, np_), out_dtype),
        grid_spec=pltpu.PrefetchScalarGridSpec(
            num_scalar_prefetch=0,
            grid=grid,
            in_specs=[
                pl.BlockSpec((tm, tk), x_map),    # activation tile
                pl.BlockSpec((tk, tn), w_map),    # W^T tile
                pl.BlockSpec((2, tn), s_map),     # fused (scale, shift)
            ],
            out_specs=pl.BlockSpec((tm, tn), o_map),
            scratch_shapes=[pltpu.VMEM((tm, tn), jnp.float32)],
        ),
        compiler_params=pltpu.CompilerParams(
            dimension_semantics=("parallel", "parallel", "arbitrary"),
            vmem_limit_bytes=vmem_limit,
        ),
        cost_estimate=pl.CostEstimate(
            flops=flops, transcendentals=0, bytes_accessed=bytes_accessed),
    )(xc, wt, ss)

    if bp != b or np_ != n_out:
        out = out[:b, :n_out]
    return out


def fc_block(x, wt, ss, n_out, *, tm_max=512, out_dtype=None):
    """FcBlock forward (eval mode).

    x:  [B, D]
    wt: [Dp, Np] pre-transposed/padded weight (from prepare_fc_block_params)
    ss: [2,  Np] fused f32 (scale, shift)
    n_out: original feature count N
    """
    b, d = x.shape
    dp, np_ = wt.shape
    assert d <= dp < d + 128, "x feature dim inconsistent with prepared weights"
    out_dtype = jnp.dtype(out_dtype if out_dtype is not None else x.dtype)

    in_item = jnp.dtype(wt.dtype).itemsize
    out_item = out_dtype.itemsize
    row_align = 16 if in_item < 4 else 8          # sub-32-bit dtypes pack 2 rows/sublane

    # Batch tile: minimize padding (b=300 -> bp=304), keep tiles MXU friendly.
    bp0 = _round_up(b, row_align)
    gm = _cdiv(bp0, tm_max)
    tm = _round_up(_cdiv(bp0, gm), row_align)
    bp = tm * gm

    # Feature / reduction tiles: largest multiple-of-128 divisors fitting the VMEM budget.
    budget = _vmem_budget_bytes()
    tn_cands = _tile_candidates(np_)
    if gm == 1 and np_ >= 256:
        # keep >= 2 steps on the parallel axes (v7x has 2 TensorCores; also enables pipelining)
        two_step = [c for c in tn_cands if np_ // c >= 2]
        if two_step:
            tn_cands = two_step
    tk_cands = _tile_candidates(dp)

    tn, tk = tn_cands[-1], tk_cands[-1]
    done = False
    for tn_c in tn_cands:
        for tk_c in tk_cands:
            if _vmem_estimate(tm, tn_c, tk_c, in_item, out_item) <= budget:
                tn, tk, done = tn_c, tk_c, True
                break
        if done:
            break

    gn, gk = np_ // tn, dp // tk
    if gk == 1:
        # Pick the grid order that minimizes streamed HBM bytes:
        #   batch-outer: bp*dp + gm*dp*np   vs   batch-inner: gn*bp*dp + dp*np
        batch_inner = (gn * bp * dp + dp * np_) < (bp * dp + gm * dp * np_)
    else:
        batch_inner = False

    return _fc_forward(x, wt, ss, n_out=int(n_out), tm=int(tm), tn=int(tn),
                       tk=int(tk), bp=int(bp), batch_inner=bool(batch_inner),
                       out_dtype=out_dtype, vmem_limit=int(budget))


def fc_block_ref(x, w, b, gamma, beta, running_mean, running_var, eps=1e-5):
    z = x @ w.T + b
    z = (z - running_mean) * jax.lax.rsqrt(running_var + eps) * gamma + beta
    return jnp.where(z > 0, z, 0.1 * z)


def _make_params(key, input_dim, num_bottleneck):
    k_w, k_g = jax.random.split(key, 2)
    # Linear: kaiming_normal_(mode='fan_out') -> std = sqrt(2 / out_features); bias = 0.
    w_std = (2.0 / num_bottleneck) ** 0.5
    w = w_std * jax.random.normal(k_w, (num_bottleneck, input_dim), dtype=jnp.float32)
    b = jnp.zeros((num_bottleneck,), dtype=jnp.float32)
    # BatchNorm1d: weight ~ N(1, 0.02), bias = 0, running_mean = 0, running_var = 1.
    gamma = 1.0 + 0.02 * jax.random.normal(k_g, (num_bottleneck,), dtype=jnp.float32)
    beta = jnp.zeros((num_bottleneck,), dtype=jnp.float32)
    running_mean = jnp.zeros((num_bottleneck,), dtype=jnp.float32)
    running_var = jnp.ones((num_bottleneck,), dtype=jnp.float32)
    return w, b, gamma, beta, running_mean, running_var


if __name__ == "__main__":
    key = jax.random.PRNGKey(0)
    k_small, k_big = jax.random.split(key, 2)

    # --- small shapes, f32 compute path: checks the folding algebra exactly ---
    batch, input_dim, num_bottleneck = 8, 128, 128
    k_x, k_p = jax.random.split(k_small, 2)
    x = jax.random.normal(k_x, (batch, input_dim), dtype=jnp.float32)
    params = _make_params(k_p, input_dim, num_bottleneck)

    wt, ss, n = prepare_fc_block_params(*params, compute_dtype=jnp.float32)
    out = jax.block_until_ready(fc_block(x, wt, ss, n))
    ref = fc_block_ref(x, *params)
    assert out.shape == (batch, num_bottleneck)
    assert jnp.allclose(out, ref, atol=1e-5, rtol=1e-5), "mismatch vs reference (f32)"

    # --- larger shape, default bf16 compute: exercises padding, tiling, grid order ---
    batch2, d2, n2 = 300, 512, 512
    k_x2, k_p2 = jax.random.split(k_big, 2)
    x2 = jax.random.normal(k_x2, (batch2, d2), dtype=jnp.float32)
    params2 = _make_params(k_p2, d2, n2)
    wt2, ss2, nn2 = prepare_fc_block_params(*params2)      # bf16 weights by default
    out2 = jax.block_until_ready(fc_block(x2, wt2, ss2, nn2))
    ref2 = fc_block_ref(x2, *params2)
    assert out2.shape == (batch2, n2)
    assert jnp.allclose(out2, ref2, atol=5e-2, rtol=5e-2), "mismatch vs reference (bf16)"

    print("KERNEL_OK")
</pallas_src>

<mosaic_0001>
module attributes {stable_mosaic.version = 11 : i64} {
  func.func @_fc_block_kernel(%arg0: i32, %arg1: i32, %arg2: i32, %arg3: memref<8x128xf32, #tpu.memory_space<vmem>>, %arg4: memref<128x128xf32, #tpu.memory_space<vmem>>, %arg5: memref<2x128xf32, #tpu.memory_space<vmem>>, %arg6: memref<8x128xf32, #tpu.memory_space<vmem>>, %arg7: memref<8x128xf32, #tpu.memory_space<vmem>>) attributes {dimension_semantics = [#tpu.dimension_semantics<parallel>, #tpu.dimension_semantics<parallel>, #tpu.dimension_semantics<arbitrary>], iteration_bounds = array<i64: 1, 1, 1>, scalar_prefetch = 0 : i64, scratch_operands = 1 : i64, tpu.core_type = #tpu.core_type<tc>, window_params = [{transform_indices = @transform_0, window_bounds = array<i64: 8, 128>}, {transform_indices = @transform_1, window_bounds = array<i64: 128, 128>}, {transform_indices = @transform_2, window_bounds = array<i64: 2, 128>}, {transform_indices = @transform_3, window_bounds = array<i64: 8, 128>}]} {
    %c0_i32 = arith.constant 0 : i32
    %0 = arith.cmpi eq, %arg2, %c0_i32 : i32
    %1 = arith.extui %0 : i1 to i32
    %c0_i32_0 = arith.constant 0 : i32
    %2 = arith.cmpi ne, %1, %c0_i32_0 : i32
    scf.if %2 {
      %cst_10 = arith.constant 0.000000e+00 : f32
      %12 = vector.broadcast %cst_10 : f32 to vector<8x128xf32>
      %c0_11 = arith.constant 0 : index
      %c0_12 = arith.constant 0 : index
      %13 = vector.load %arg7[%c0_11, %c0_12] : memref<8x128xf32, #tpu.memory_space<vmem>>, vector<8x128xf32>
      tpu.vector_store %arg7[%c0_11, %c0_12], %12 {strides = array<i32>} : memref<8x128xf32, #tpu.memory_space<vmem>>, vector<8x128xf32>,
    } else {
    }
    %c0 = arith.constant 0 : index
    %c0_1 = arith.constant 0 : index
    %3 = vector.load %arg7[%c0, %c0_1] : memref<8x128xf32, #tpu.memory_space<vmem>>, vector<8x128xf32>
    %c0_2 = arith.constant 0 : index
    %c0_3 = arith.constant 0 : index
    %4 = vector.load %arg3[%c0_2, %c0_3] : memref<8x128xf32, #tpu.memory_space<vmem>>, vector<8x128xf32>
    %c0_4 = arith.constant 0 : index
    %c0_5 = arith.constant 0 : index
    %5 = vector.load %arg4[%c0_4, %c0_5] : memref<128x128xf32, #tpu.memory_space<vmem>>, vector<128x128xf32>
    %cst = arith.constant dense<0.000000e+00> : vector<8x128xf32>
    %6 = tpu.matmul %4, %5, %cst {dimension_numbers = #tpu.dot_dimension_numbers<[1], [0], [0], [1], [0, 0, 1, 1], [], []>} : vector<8x128xf32>, vector<128x128xf32>, vector<8x128xf32> -> vector<8x128xf32>
    %7 = arith.addf %3, %6 : vector<8x128xf32>
    %c0_6 = arith.constant 0 : index
    %c0_7 = arith.constant 0 : index
    %8 = vector.load %arg7[%c0_6, %c0_7] : memref<8x128xf32, #tpu.memory_space<vmem>>, vector<8x128xf32>
    tpu.vector_store %arg7[%c0_6, %c0_7], %7 {strides = array<i32>} : memref<8x128xf32, #tpu.memory_space<vmem>>, vector<8x128xf32>,
    %c0_i32_8 = arith.constant 0 : i32
    %9 = arith.cmpi eq, %arg2, %c0_i32_8 : i32
    %10 = arith.extui %9 : i1 to i32
    %c0_i32_9 = arith.constant 0 : i32
    %11 = arith.cmpi ne, %10, %c0_i32_9 : i32
    scf.if %11 {
      %c0_10 = arith.constant 0 : index
      %c0_11 = arith.constant 0 : index
      %12 = vector.load %arg7[%c0_10, %c0_11] : memref<8x128xf32, #tpu.memory_space<vmem>>, vector<8x128xf32>
      %c0_12 = arith.constant 0 : index
      %c0_13 = arith.constant 0 : index
      %13 = vector.load %arg5[%c0_12, %c0_13] : memref<2x128xf32, #tpu.memory_space<vmem>>, vector<1x128xf32>
      %14 = vector.broadcast %13 : vector<1x128xf32> to vector<8x128xf32>
      %15 = arith.mulf %12, %14 : vector<8x128xf32>
      %c1 = arith.constant 1 : index
      %c0_14 = arith.constant 0 : index
      %16 = vector.load %arg5[%c1, %c0_14] : memref<2x128xf32, #tpu.memory_space<vmem>>, vector<1x128xf32>
      %17 = vector.broadcast %16 : vector<1x128xf32> to vector<8x128xf32>
      %18 = arith.addf %15, %17 : vector<8x128xf32>
      %cst_15 = arith.constant 0.000000e+00 : f32
      %19 = vector.broadcast %cst_15 : f32 to vector<8x128xf32>
      %20 = arith.cmpf ogt, %18, %19 : vector<8x128xf32>
      %cst_16 = arith.constant 1.000000e-01 : f32
      %21 = vector.broadcast %cst_16 : f32 to vector<8x128xf32>
      %22 = arith.mulf %21, %18 : vector<8x128xf32>
      %23 = arith.select %20, %18, %22 : vector<8x128xi1>, vector<8x128xf32>
      %c0_17 = arith.constant 0 : index
      %c0_18 = arith.constant 0 : index
      %24 = vector.load %arg6[%c0_17, %c0_18] : memref<8x128xf32, #tpu.memory_space<vmem>>, vector<8x128xf32>
      tpu.vector_store %arg6[%c0_17, %c0_18], %23 {strides = array<i32>} : memref<8x128xf32, #tpu.memory_space<vmem>>, vector<8x128xf32>,
    } else {
    }
    return
  }
  func.func @transform_0(%arg0: i32, %arg1: i32, %arg2: i32) -> (i32, i32) {
    %c0_i32 = arith.constant 0 : i32
    return %arg0, %arg2 : i32, i32
  }
  func.func @transform_1(%arg0: i32, %arg1: i32, %arg2: i32) -> (i32, i32) {
    %c0_i32 = arith.constant 0 : i32
    return %arg2, %arg1 : i32, i32
  }
  func.func @transform_2(%arg0: i32, %arg1: i32, %arg2: i32) -> (i32, i32) {
    %c0_i32 = arith.constant 0 : i32
    %c0_i32_0 = arith.constant 0 : i32
    return %c0_i32, %arg1 : i32, i32
  }
  func.func @transform_3(%arg0: i32, %arg1: i32, %arg2: i32) -> (i32, i32) {
    %c0_i32 = arith.constant 0 : i32
    return %arg0, %arg1 : i32, i32
  }
}

</mosaic_0001>

<llo_original>
// kernel: _fc_forward.1
$region0: #{_fc_forward.1}
  #allocation0 [shape = 'u32[]', space=smem, size = 0x4, offset = 0x4, fixed_abs, tag = 'smem constant byte address 0x4 - core index']
  #allocation1 [shape = 'u32[144,128]{1,0:T(1,128)}', space=vmem, size = 0x12000, scoped, tag = 'internal scratch']
  #allocation2 [shape = 'f32[8,128]{1,0:T(8,128)}', space=vmem, size = 0x1000, scoped, tag = 'scratch operand']
  %s0 = inlined_call_operand.hbm [shape: f32[8,128], index: 0, kind: input, shape index: {}]
  %s1 = inlined_call_operand.hbm [shape: f32[128,128], index: 1, kind: input, shape index: {}]
  %s2 = inlined_call_operand.vmem [shape: f32[2,128], index: 2, kind: input, shape index: {}]
  %s3 = inlined_call_operand.hbm [shape: f32[8,128], index: 3, kind: output, shape index: {}]
  %s4 = sld [smem:[#allocation0]]
  $region38: #{_fc_forward.1} parent=0
    _
  %s6 = ssub.s32 1, %s4
  %s7 = scalar_select 0, %s6, %s4
  $region1: #{_fc_forward.1} parent=0
    #allocation3 [shape = 'u8[4096]{0}', space=vmem, size = 0x1000, scoped, tag = 'input window, operand 0, single buffered']
    #allocation4 [shape = 's32[1]{0}', space=sflag, size = 0x4, scoped, tag = 'scoped memory for _fc_forward.1']
    #allocation5 [shape = 's32[1]{0}', space=sflag, size = 0x4, scoped, tag = 'scoped memory for _fc_forward.1']
    #allocation6 [shape = 'u8[65536]{0}', space=vmem, size = 0x10000, scoped, tag = 'input window, operand 1, single buffered']
    #allocation7 [shape = 's32[1]{0}', space=sflag, size = 0x4, scoped, tag = 'scoped memory for _fc_forward.1']
    #allocation8 [shape = 'u8[4096]{0}', space=vmem, size = 0x1000, scoped, tag = 'output window, operand 0, single buffered']
    %8 = vsyncpa [#allocation4], 0
    %9 = vsyncpa [#allocation7], 0
    %10 = vsyncpa [#allocation5], 0
    // Predicated region
    $region2: #{_fc_forward.1} parent=1 // pred_check
      _
    $region3: #{_fc_forward.1} parent=1 // pred_check_branch
      %12 = sbr.rel (0) target = $region5
    $region4: #{_fc_forward.1} parent=1 // pred_region
      %s14 = ssub.s32 128, 128
      %15 = vsyncadd [#allocation4], %s14
      %s17 = sshll.u32 [#allocation3], 4
      %s18 = int_to_ptr.vmem [resolvable:$true] %s17
      %20 = dma.hbm_to_vmem [thread:$0]  %s0, 128, %s18, [#allocation4]
    $region5: #{_fc_forward.1} parent=1 // pred_fallthru
      _
    // Predicated region
    $region6: #{_fc_forward.1} parent=1 // pred_check
      _
    $region7: #{_fc_forward.1} parent=1 // pred_check_branch
      %22 = sbr.rel (0) target = $region9
    $region8: #{_fc_forward.1} parent=1 // pred_region
      %s24 = ssub.s32 2048, 2048
      %25 = vsyncadd [#allocation7], %s24
      %s26 = sshll.u32 [#allocation6], 4
      %s27 = int_to_ptr.vmem [resolvable:$true] %s26
      %32 = dma.hbm_to_vmem [thread:$0]  %s1, 2048, %s27, [#allocation7], 128, 128, 8
    $region9: #{_fc_forward.1} parent=1 // pred_fallthru
      _
    // Predicated region
    $region10: #{_fc_forward.1} parent=1 // pred_check
      _
    $region11: #{_fc_forward.1} parent=1 // pred_check_branch
      %34 = sbr.rel (0) target = $region13
    $region12: #{_fc_forward.1} parent=1 // pred_region
      _
    $region13: #{_fc_forward.1} parent=1 // pred_fallthru
      _
    // Predicated region
    $region14: #{_fc_forward.1} parent=1 // pred_check
      _
    $region15: #{_fc_forward.1} parent=1 // pred_check_branch
      %36 = sbr.rel (0) target = $region17
    $region16: #{_fc_forward.1} parent=1 // pred_region
      %37 = dma.done [#allocation4], 128
    $region17: #{_fc_forward.1} parent=1 // pred_fallthru
      _
    // Predicated region
    $region18: #{_fc_forward.1} parent=1 // pred_check
      _
    $region19: #{_fc_forward.1} parent=1 // pred_check_branch
      %39 = sbr.rel (0) target = $region21
    $region20: #{_fc_forward.1} parent=1 // pred_region
      %40 = dma.done [#allocation7], 2048
    $region21: #{_fc_forward.1} parent=1 // pred_fallthru
      _
    %p41 = scmp.eq.s32.totalorder 0, 0
    // Predicated region
    $region22: #{_fc_forward.1} parent=1 // pred_check
      %p42 = pneg %p41
    $region23: #{_fc_forward.1} parent=1 // pred_check_branch
      %44 = sbr.rel (%p42) target = $region25
    $region24: #{_fc_forward.1} parent=1 // pred_region
      %45 = vst [vmem:[#allocation2] sm:$0xff] 0.0
    $region25: #{_fc_forward.1} parent=1 // pred_fallthru
      _
    %v46 = vld [vmem:[#allocation2] sm:$0xff]
    %v47 = vld [vmem:[#allocation3] sm:$0xff]
    %v48 = vld [vmem:[#allocation6] sm:$0xff]
    %v49 = vld [vmem:[#allocation6 + $0x8] sm:$0xff]
    %v50 = vld [vmem:[#allocation6 + $0x10] sm:$0xff]
    %v51 = vld [vmem:[#allocation6 + $0x18] sm:$0xff]
    %v52 = vld [vmem:[#allocation6 + $0x20] sm:$0xff]
    %v53 = vld [vmem:[#allocation6 + $0x28] sm:$0xff]
    %v54 = vld [vmem:[#allocation6 + $0x30] sm:$0xff]
    %v55 = vld [vmem:[#allocation6 + $0x38] sm:$0xff]
    %v56 = vld [vmem:[#allocation6 + $0x40] sm:$0xff]
    %v57 = vld [vmem:[#allocation6 + $0x48] sm:$0xff]
    %v58 = vld [vmem:[#allocation6 + $0x50] sm:$0xff]
    %v59 = vld [vmem:[#allocation6 + $0x58] sm:$0xff]
    %v60 = vld [vmem:[#allocation6 + $0x60] sm:$0xff]
    %v61 = vld [vmem:[#allocation6 + $0x68] sm:$0xff]
    %v62 = vld [vmem:[#allocation6 + $0x70] sm:$0xff]
    %v63 = vld [vmem:[#allocation6 + $0x78] sm:$0xff]
    %64 = vmatprep.subr.mxu0 0.0
    %65 = vmatpush1.msra.mxu0 %v63
    %66 = vmatprep.subr.mxu0 0.0
    %67 = vmatpush1.msra.mxu0 %v62
    %68 = vmatprep.subr.mxu0 0.0
    %69 = vmatpush1.msra.mxu0 %v61
    %70 = vmatprep.subr.mxu0 0.0
    %71 = vmatpush1.msra.mxu0 %v60
    %72 = vmatprep.subr.mxu0 0.0
    %73 = vmatpush1.msra.mxu0 %v59
    %74 = vmatprep.subr.mxu0 0.0
    %75 = vmatpush1.msra.mxu0 %v58
    %76 = vmatprep.subr.mxu0 0.0
    %77 = vmatpush1.msra.mxu0 %v57
    %78 = vmatprep.subr.mxu0 0.0
    %79 = vmatpush1.msra.mxu0 %v56
    %80 = vmatprep.subr.mxu0 0.0
    %81 = vmatpush1.msra.mxu0 %v55
    %82 = vmatprep.subr.mxu0 0.0
    %83 = vmatpush1.msra.mxu0 %v54
    %84 = vmatprep.subr.mxu0 0.0
    %85 = vmatpush1.msra.mxu0 %v53
    %86 = vmatprep.subr.mxu0 0.0
    %87 = vmatpush1.msra.mxu0 %v52
    %88 = vmatprep.subr.mxu0 0.0
    %89 = vmatpush1.msra.mxu0 %v51
    %90 = vmatprep.subr.mxu0 0.0
    %91 = vmatpush1.msra.mxu0 %v50
    %92 = vmatprep.subr.mxu0 0.0
    %93 = vmatpush1.msra.mxu0 %v49
    %94 = vmatprep.subr.mxu0 0.0
    %95 = vmatpush1.msra.mxu0 %v48
    %96 = vmatprep.subr.mxu0 0.0
    %97 = vmatpush2.msra.mxu0 0.0
    %98 = vmatprep.subr.mxu0 0.0
    %99 = vmatpush2.msra.mxu0 0.0
    %100 = vmatprep.subr.mxu0 0.0
    %101 = vmatpush2.msra.mxu0 0.0
    %102 = vmatprep.subr.mxu0 0.0
    %103 = vmatpush2.msra.mxu0 0.0
    %104 = vmatprep.subr.mxu0 0.0
    %105 = vmatpush2.msra.mxu0 0.0
    %106 = vmatprep.subr.mxu0 0.0
    %107 = vmatpush2.msra.mxu0 0.0
    %108 = vmatprep.subr.mxu0 0.0
    %109 = vmatpush2.msra.mxu0 0.0
    %110 = vmatprep.subr.mxu0 0.0
    %111 = vmatpush2.msra.mxu0 0.0
    %112 = vmatprep.subr.mxu0 0.0
    %113 = vmatpush2.msra.mxu0 0.0
    %114 = vmatprep.subr.mxu0 0.0
    %115 = vmatpush2.msra.mxu0 0.0
    %116 = vmatprep.subr.mxu0 0.0
    %117 = vmatpush2.msra.mxu0 0.0
    %118 = vmatprep.subr.mxu0 0.0
    %119 = vmatpush2.msra.mxu0 0.0
    %120 = vmatprep.subr.mxu0 0.0
    %121 = vmatpush2.msra.mxu0 0.0
    %122 = vmatprep.subr.mxu0 0.0
    %123 = vmatpush2.msra.mxu0 0.0
    %124 = vmatprep.subr.mxu0 0.0
    %125 = vmatpush2.msra.mxu0 0.0
    %126 = vmatprep.subr.mxu0 0.0
    %127 = vmatpush2.msra.mxu0 0.0
    %128 = vmatprep.mubr.f32.mxu0 0.0
    %129 = vmatmul.mubr.f32.gmra.mxu0 %v47
    %v130 = vpop.f32.mrf.mxu0
    %v131 = vadd.f32 0.0, %v130
    %v132 = vpop.f32.mrf.mxu0
    %133 = vdwg.mxu0
    %v134 = vadd.f32 %v46, %v131
    %135 = vst [vmem:[#allocation2] sm:$0xff] %v134
    // Predicated region
    $region26: #{_fc_forward.1} parent=1 // pred_check
      %p136 = pneg %p41
    $region27: #{_fc_forward.1} parent=1 // pred_check_branch
      %138 = sbr.rel (%p136) target = $region29
    $region28: #{_fc_forward.1} parent=1 // pred_region
      %v139 = vld [vmem:[#allocation2] sm:$0xff]
      %v140 = vld [vmem:[%s2] sm:$0x1]
      %v141 = vlaneseq
      %v142 = vshrl.u32 %v141, 7
      %v143 = vsub.s32 0, %v142
      %v144 = vrot.slane %v140, %v143
      %v145 = vmul.f32 %v139, %v144
      %v146 = vld [vmem:[%s2 + $0x1] sm:$0x1]
      %v147 = vlaneseq
      %v148 = vshrl.u32 %v147, 7
      %v149 = vsub.s32 0, %v148
      %v150 = vrot.slane %v146, %v149
      %v151 = vadd.f32 %v145, %v150
      %vm152 = vcmp.gt.f32.partialorder %v151, 0.0
      %v153 = vmul.f32 %v151, 0.1
      %v154 = vsel %vm152, %v151, %v153
      %155 = vst [vmem:[#allocation8] sm:$0xff] %v154
    $region29: #{_fc_forward.1} parent=1 // pred_fallthru
      _
    // Predicated region
    $region30: #{_fc_forward.1} parent=1 // pred_check
      _
    $region31: #{_fc_forward.1} parent=1 // pred_check_branch
      %157 = sbr.rel (0) target = $region33
    $region32: #{_fc_forward.1} parent=1 // pred_region
      %s159 = ssub.s32 128, 128
      %160 = vsyncadd [#allocation5], %s159
      %s162 = sshll.u32 [#allocation8], 4
      %s163 = int_to_ptr.vmem [resolvable:$true] %s162
      %165 = dma.vmem_to_hbm [thread:$0]  %s163, 128, %s3, [#allocation5]
    $region33: #{_fc_forward.1} parent=1 // pred_fallthru
      _
    // Predicated region
    $region34: #{_fc_forward.1} parent=1 // pred_check
      _
    $region35: #{_fc_forward.1} parent=1 // pred_check_branch
      %167 = sbr.rel (0) target = $region37
    $region36: #{_fc_forward.1} parent=1 // pred_region
      %168 = dma.done [#allocation5], 128
    $region37: #{_fc_forward.1} parent=1 // pred_fallthru
      _
    %169 = vsyncpa [#allocation4], 1
    %170 = vsyncpa [#allocation7], 1
    %171 = vsyncpa [#allocation5], 1

</llo_original>
